<compile_context>
chip_gen: v6e
topology: v6e:2x2x1
jax: 0.10.0
libtpu: 0.0.40
codegen_flags: <defaults>
</compile_context>

<pallas_src>
import functools

import jax
import jax.numpy as jnp
from jax.experimental import pallas as pl
from jax.experimental.pallas import tpu as pltpu


# ---------------------------------------------------------------------------
# VMEM budgeting (generation-aware)
# ---------------------------------------------------------------------------
def _vmem_budget():
    """Return (vmem_limit_bytes, data_budget_bytes) for the local TPU."""
    cap = None
    try:
        info = pltpu.get_tpu_info()
        cap = getattr(info, "vmem_capacity_bytes", None)
    except Exception:
        cap = None
    if not cap:
        cap = 64 * 1024 * 1024          # conservative default = v7x per-core VMEM
    limit = min(int(cap) * 3 // 4, 100 * 1024 * 1024)   # scoped limit w/ headroom
    data = (limit * 3) // 5                              # budget for pipelined tiles
    return limit, data


def _round_up(n, m):
    return ((n + m - 1) // m) * m


def _pick_tile_rows(n_rows, d, itemsize, bufs_per_row, data_budget,
                    extra_resident_bytes=0, min_grid_steps=4):
    """Row-tile size that fills the VMEM budget but keeps >= min_grid_steps
    grid steps when n_rows allows (so both v7x TensorCores receive work)."""
    align = 8 if itemsize >= 4 else (16 if itemsize == 2 else 32)
    avail = data_budget - extra_resident_bytes
    if avail <= 0:
        raise ValueError(
            "resident operand too large for the VMEM budget; use the unfused "
            "sublayer_connection() path (or a K-tiled fused variant) instead")
    per_row = bufs_per_row * d * itemsize
    tr = max(avail // per_row, align)
    tr = min((tr // align) * align, 1024)
    # Keep at least `min_grid_steps` grid steps when the row count allows it.
    parallel_cap = _round_up(-(-n_rows // min_grid_steps), align)
    tr = min(tr, max(parallel_cap, align))
    return max(int(tr), align)


def _grid_invariant_spec(block_shape):
    """BlockSpec for a grid-invariant operand (constant index_map).

    Single-buffered (pl.Buffered(1)) when supported: these operands are fetched
    once, so double-buffering them only burns VMEM."""
    index_map = lambda i: (0,) * len(block_shape)
    if hasattr(pl, "Buffered"):
        try:
            return pl.BlockSpec(block_shape, index_map,
                                pipeline_mode=pl.Buffered(1))
        except TypeError:
            pass
    return pl.BlockSpec(block_shape, index_map)


def _compiler_params(vmem_limit_bytes):
    return pltpu.CompilerParams(
        dimension_semantics=("parallel",),       # shard row tiles across cores
        vmem_limit_bytes=int(vmem_limit_bytes),
    )


# ---------------------------------------------------------------------------
# Kernel bodies
# ---------------------------------------------------------------------------
def _layer_norm_f32(y, a, b, eps, d):
    # y: (T, D) f32;  a, b: (1, D) f32.  Two-pass stats (numerically robust),
    # unbiased std (D-1), eps added to std -- matches the custom PyTorch LN.
    mean = jnp.sum(y, axis=-1, keepdims=True) * (1.0 / d)
    yc = y - mean
    var = jnp.sum(yc * yc, axis=-1, keepdims=True) * (1.0 / (d - 1))
    std = jnp.sqrt(var)
    inv = pl.reciprocal(std + eps, approx=False)   # per-row (T,1); exact
    return yc * (inv * a) + b


def _residual_ln_kernel(x_ref, s_ref, a_ref, b_ref, o_ref, *, eps, d):
    y = x_ref[...].astype(jnp.float32) + s_ref[...].astype(jnp.float32)
    a = a_ref[...].astype(jnp.float32)
    b = b_ref[...].astype(jnp.float32)
    o_ref[...] = _layer_norm_f32(y, a, b, eps, d).astype(o_ref.dtype)


def _fused_linear_ln_kernel(x_ref, w_ref, a_ref, b_ref, o_ref, *, eps, d, mm_dtype):
    x = x_ref[...]
    # Sublayer = linear projection on the MXU: low-precision operands, f32 acc.
    # (At D=128 the win is removing the [R, D] HBM round-trip, not MXU flops.)
    sub = jnp.dot(x.astype(mm_dtype), w_ref[...].astype(mm_dtype),
                  preferred_element_type=jnp.float32)
    y = x.astype(jnp.float32) + sub
    a = a_ref[...].astype(jnp.float32)
    b = b_ref[...].astype(jnp.float32)
    o_ref[...] = _layer_norm_f32(y, a, b, eps, d).astype(o_ref.dtype)


# ---------------------------------------------------------------------------
# Wrappers
# ---------------------------------------------------------------------------
def sublayer_connection(x, sublayer_out, a_2, b_2, eps=1e-6):
    """Generic path: out = LayerNorm(x + sublayer_out).  x: [B, S, D]."""
    B, S, D = x.shape
    R = B * S
    itemsize = jnp.dtype(x.dtype).itemsize
    vmem_limit, data_budget = _vmem_budget()
    # 2 row inputs + 1 row output, each double-buffered -> 6 buffered rows.
    tile_rows = _pick_tile_rows(R, D, itemsize, bufs_per_row=6,
                                data_budget=data_budget)

    x2 = x.reshape(R, D)
    s2 = sublayer_out.reshape(R, D)
    a2 = a_2.reshape(1, D)
    b2 = b_2.reshape(1, D)

    kernel = functools.partial(_residual_ln_kernel, eps=eps, d=D)
    out = pl.pallas_call(
        kernel,
        out_shape=jax.ShapeDtypeStruct((R, D), x.dtype),
        grid_spec=pltpu.PrefetchScalarGridSpec(
            num_scalar_prefetch=0,
            grid=(pl.cdiv(R, tile_rows),),       # partial last block handled by Pallas
            in_specs=[
                pl.BlockSpec((tile_rows, D), lambda i: (i, 0)),
                pl.BlockSpec((tile_rows, D), lambda i: (i, 0)),
                _grid_invariant_spec((1, D)),
                _grid_invariant_spec((1, D)),
            ],
            out_specs=pl.BlockSpec((tile_rows, D), lambda i: (i, 0)),
        ),
        compiler_params=_compiler_params(vmem_limit),
    )(x2, s2, a2, b2)

    return out.reshape(B, S, D)


def sublayer_connection_linear(x, W, a_2, b_2, eps=1e-6,
                               matmul_dtype=jnp.bfloat16):
    """Fused path for sublayer(x) = x @ W: out = LayerNorm(x + x @ W)."""
    B, S, D = x.shape
    assert W.shape == (D, D)
    R = B * S
    itemsize = jnp.dtype(x.dtype).itemsize
    vmem_limit, data_budget = _vmem_budget()
    w_bytes = D * D * jnp.dtype(W.dtype).itemsize   # W single-buffered (Buffered(1))
    # TODO(synk): for very large D where W does not fit the budget, a K-tiled
    # 2-D grid (rows x K, accumulate into f32 scratch) would keep VMEM bounded.
    tile_rows = _pick_tile_rows(R, D, itemsize, bufs_per_row=4,
                                data_budget=data_budget,
                                extra_resident_bytes=w_bytes)

    x2 = x.reshape(R, D)
    a2 = a_2.reshape(1, D)
    b2 = b_2.reshape(1, D)

    kernel = functools.partial(_fused_linear_ln_kernel, eps=eps, d=D,
                               mm_dtype=matmul_dtype)
    out = pl.pallas_call(
        kernel,
        out_shape=jax.ShapeDtypeStruct((R, D), x.dtype),
        grid_spec=pltpu.PrefetchScalarGridSpec(
            num_scalar_prefetch=0,
            grid=(pl.cdiv(R, tile_rows),),
            in_specs=[
                pl.BlockSpec((tile_rows, D), lambda i: (i, 0)),
                _grid_invariant_spec((D, D)),        # W resident, single-buffered
                _grid_invariant_spec((1, D)),
                _grid_invariant_spec((1, D)),
            ],
            out_specs=pl.BlockSpec((tile_rows, D), lambda i: (i, 0)),
        ),
        compiler_params=_compiler_params(vmem_limit),
    )(x2, W, a2, b2)

    return out.reshape(B, S, D)


# ---------------------------------------------------------------------------
# Pure-JAX reference (matches the PyTorch module exactly)
# ---------------------------------------------------------------------------
def reference(x, sublayer_out, a_2, b_2, eps=1e-6):
    y = x + sublayer_out
    mean = jnp.mean(y, axis=-1, keepdims=True)
    var = jnp.sum((y - mean) ** 2, axis=-1, keepdims=True) / (y.shape[-1] - 1)
    std = jnp.sqrt(var)
    return a_2 * (y - mean) / (std + eps) + b_2


if __name__ == "__main__":
    key = jax.random.PRNGKey(0)
    B, S, D = 2, 8, 128   # D multiple of 128 -> lane-dense output stores

    k_x, k_w = jax.random.split(key)
    x = jax.random.normal(k_x, (B, S, D), dtype=jnp.float32)

    # Deterministic "sublayer": a linear projection x @ W.
    W = jax.random.normal(k_w, (D, D), dtype=jnp.float32) * 0.05

    # LayerNorm params as in __init__: ones / zeros of shape (features,)
    a_2 = jnp.ones((D,), dtype=jnp.float32)
    b_2 = jnp.zeros((D,), dtype=jnp.float32)

    sublayer_out = jnp.einsum("bsd,de->bse", x, W,
                              precision=jax.lax.Precision.HIGHEST)
    ref = reference(x, sublayer_out, a_2, b_2)

    # 1) generic path: residual + LayerNorm over a precomputed sublayer output
    out_generic = jax.block_until_ready(
        sublayer_connection(x, sublayer_out, a_2, b_2))
    assert out_generic.shape == (B, S, D)
    assert jnp.allclose(out_generic, ref, atol=1e-4, rtol=1e-4), \
        "generic path mismatch vs reference"

    # 2) fused path: sublayer matmul on the MXU (bf16 operands, f32 accumulate).
    #    Tolerance retuned for the deliberate bf16 matmul precision change.
    out_fused = jax.block_until_ready(
        sublayer_connection_linear(x, W, a_2, b_2))
    assert out_fused.shape == (B, S, D)
    assert jnp.allclose(out_fused, ref, atol=2e-2, rtol=2e-2), \
        "fused path mismatch vs reference"

    # 3) bf16 HBM streams (halves the three R x D passes; stats stay f32).
    xb = x.astype(jnp.bfloat16)
    sb = sublayer_out.astype(jnp.bfloat16)
    out_bf16 = jax.block_until_ready(sublayer_connection(xb, sb, a_2, b_2))
    assert out_bf16.dtype == jnp.bfloat16
    ref_bf16 = reference(xb.astype(jnp.float32), sb.astype(jnp.float32), a_2, b_2)
    assert jnp.allclose(out_bf16.astype(jnp.float32), ref_bf16,
                        atol=4e-2, rtol=4e-2), \
        "bf16 generic path mismatch vs reference"

    print("KERNEL_OK")
</pallas_src>

<mosaic_0001>
module attributes {stable_mosaic.version = 11 : i64} {
  func.func @_residual_ln_kernel(%arg0: i32, %arg1: memref<8x128xf32, #tpu.memory_space<vmem>>, %arg2: memref<8x128xf32, #tpu.memory_space<vmem>>, %arg3: memref<1x128xf32, #tpu.memory_space<vmem>>, %arg4: memref<1x128xf32, #tpu.memory_space<vmem>>, %arg5: memref<8x128xf32, #tpu.memory_space<vmem>>) attributes {dimension_semantics = [#tpu.dimension_semantics<parallel>], iteration_bounds = array<i64: 2>, scalar_prefetch = 0 : i64, scratch_operands = 0 : i64, tpu.core_type = #tpu.core_type<tc>, window_params = [{transform_indices = @transform_0, window_bounds = array<i64: 8, 128>}, {transform_indices = @transform_1, window_bounds = array<i64: 8, 128>}, {pipeline_mode = #tpu.pipeline_mode<synchronous>, transform_indices = @transform_2, window_bounds = array<i64: 1, 128>}, {pipeline_mode = #tpu.pipeline_mode<synchronous>, transform_indices = @transform_3, window_bounds = array<i64: 1, 128>}, {transform_indices = @transform_4, window_bounds = array<i64: 8, 128>}]} {
    %c0 = arith.constant 0 : index
    %c0_0 = arith.constant 0 : index
    %0 = vector.load %arg1[%c0, %c0_0] : memref<8x128xf32, #tpu.memory_space<vmem>>, vector<8x128xf32>
    %c0_1 = arith.constant 0 : index
    %c0_2 = arith.constant 0 : index
    %1 = vector.load %arg2[%c0_1, %c0_2] : memref<8x128xf32, #tpu.memory_space<vmem>>, vector<8x128xf32>
    %2 = arith.addf %0, %1 : vector<8x128xf32>
    %c0_3 = arith.constant 0 : index
    %c0_4 = arith.constant 0 : index
    %3 = vector.load %arg3[%c0_3, %c0_4] : memref<1x128xf32, #tpu.memory_space<vmem>>, vector<1x128xf32>
    %c0_5 = arith.constant 0 : index
    %c0_6 = arith.constant 0 : index
    %4 = vector.load %arg4[%c0_5, %c0_6] : memref<1x128xf32, #tpu.memory_space<vmem>>, vector<1x128xf32>
    %cst = arith.constant dense<0.000000e+00> : vector<8xf32>
    %5 = vector.multi_reduction <add>, %2, %cst [1] : vector<8x128xf32> to vector<8xf32>
    %6 = vector.shape_cast %5 : vector<8xf32> to vector<8x1xf32>
    %cst_7 = arith.constant 7.812500e-03 : f32
    %7 = vector.broadcast %cst_7 : f32 to vector<8x1xf32>
    %8 = arith.mulf %6, %7 : vector<8x1xf32>
    %9 = vector.broadcast %8 : vector<8x1xf32> to vector<8x128xf32>
    %10 = arith.subf %2, %9 : vector<8x128xf32>
    %11 = arith.mulf %10, %10 : vector<8x128xf32>
    %cst_8 = arith.constant dense<0.000000e+00> : vector<8xf32>
    %12 = vector.multi_reduction <add>, %11, %cst_8 [1] : vector<8x128xf32> to vector<8xf32>
    %13 = vector.shape_cast %12 : vector<8xf32> to vector<8x1xf32>
    %cst_9 = arith.constant 0.00787401571 : f32
    %14 = vector.broadcast %cst_9 : f32 to vector<8x1xf32>
    %15 = arith.mulf %13, %14 : vector<8x1xf32>
    %16 = math.sqrt %15 : vector<8x1xf32>
    %cst_10 = arith.constant 9.99999997E-7 : f32
    %17 = vector.broadcast %cst_10 : f32 to vector<8x1xf32>
    %18 = arith.addf %16, %17 : vector<8x1xf32>
    %19 = tpu.reciprocal %18 : vector<8x1xf32> -> vector<8x1xf32>
    %20 = vector.broadcast %19 : vector<8x1xf32> to vector<8x128xf32>
    %21 = vector.broadcast %3 : vector<1x128xf32> to vector<8x128xf32>
    %22 = arith.mulf %20, %21 : vector<8x128xf32>
    %23 = arith.mulf %10, %22 : vector<8x128xf32>
    %24 = vector.broadcast %4 : vector<1x128xf32> to vector<8x128xf32>
    %25 = arith.addf %23, %24 : vector<8x128xf32>
    %c0_11 = arith.constant 0 : index
    %c0_12 = arith.constant 0 : index
    %26 = vector.load %arg5[%c0_11, %c0_12] : memref<8x128xf32, #tpu.memory_space<vmem>>, vector<8x128xf32>
    tpu.vector_store %arg5[%c0_11, %c0_12], %25 {strides = array<i32>} : memref<8x128xf32, #tpu.memory_space<vmem>>, vector<8x128xf32>,
    return
  }
  func.func @transform_0(%arg0: i32) -> (i32, i32) {
    %c0_i32 = arith.constant 0 : i32
    %c0_i32_0 = arith.constant 0 : i32
    return %arg0, %c0_i32 : i32, i32
  }
  func.func @transform_1(%arg0: i32) -> (i32, i32) {
    %c0_i32 = arith.constant 0 : i32
    %c0_i32_0 = arith.constant 0 : i32
    return %arg0, %c0_i32 : i32, i32
  }
  func.func @transform_2(%arg0: i32) -> (i32, i32) {
    %c0_i32 = arith.constant 0 : i32
    %c0_i32_0 = arith.constant 0 : i32
    %c0_i32_1 = arith.constant 0 : i32
    return %c0_i32, %c0_i32_0 : i32, i32
  }
  func.func @transform_3(%arg0: i32) -> (i32, i32) {
    %c0_i32 = arith.constant 0 : i32
    %c0_i32_0 = arith.constant 0 : i32
    %c0_i32_1 = arith.constant 0 : i32
    return %c0_i32, %c0_i32_0 : i32, i32
  }
  func.func @transform_4(%arg0: i32) -> (i32, i32) {
    %c0_i32 = arith.constant 0 : i32
    %c0_i32_0 = arith.constant 0 : i32
    return %arg0, %c0_i32 : i32, i32
  }
}

</mosaic_0001>

<llo_original>
// kernel: tpu_custom_call.1
$region0: #{tpu_custom_call.1}
  #allocation0 [shape = 'u32[]', space=smem, size = 0x4, offset = 0x4, fixed_abs, tag = 'smem constant byte address 0x4 - core index']
  #allocation1 [shape = 'u32[144,128]{1,0:T(1,128)}', space=vmem, size = 0x12000, scoped, tag = 'internal scratch']
  %s0 = inlined_call_operand.hbm [shape: f32[16,128], index: 0, kind: input, shape index: {}]
  %s1 = inlined_call_operand.hbm [shape: f32[16,128], index: 1, kind: input, shape index: {}]
  %s2 = inlined_call_operand.vmem [shape: f32[1,128], index: 2, kind: input, shape index: {}]
  %s3 = inlined_call_operand.vmem [shape: f32[1,128], index: 3, kind: input, shape index: {}]
  %s4 = inlined_call_operand.hbm [shape: f32[16,128], index: 4, kind: output, shape index: {}]
  %s5 = sld [smem:[#allocation0]]
  $region57: #{tpu_custom_call.1} parent=0
    _
  %s7 = ssub.s32 1, %s5
  %s8 = scalar_select 0, %s7, %s5
  $region1: #{tpu_custom_call.1} parent=0
    #allocation2 [shape = 'u8[8192]{0}', space=vmem, size = 0x2000, scoped, tag = 'input window, operand 0']
    #allocation3 [shape = 's32[2]{0}', space=sflag, size = 0x8, scoped, tag = 'scoped memory for tpu_custom_call.1']
    #allocation4 [shape = 's32[2]{0}', space=sflag, size = 0x8, scoped, tag = 'scoped memory for tpu_custom_call.1']
    #allocation5 [shape = 'u8[8192]{0}', space=vmem, size = 0x2000, scoped, tag = 'input window, operand 1']
    #allocation6 [shape = 's32[2]{0}', space=sflag, size = 0x8, scoped, tag = 'scoped memory for tpu_custom_call.1']
    #allocation7 [shape = 'u8[8192]{0}', space=vmem, size = 0x2000, scoped, tag = 'output window, operand 0']
    %9 = vsyncpa [#allocation3], 0
    %s10 = scalar_lea.sflag [#allocation3], 1
    %11 = vsyncpa %s10, 0
    %12 = vsyncpa [#allocation6], 0
    %s13 = scalar_lea.sflag [#allocation6], 1
    %14 = vsyncpa %s13, 0
    %15 = vsyncpa [#allocation4], 0
    %s16 = scalar_lea.sflag [#allocation4], 1
    %17 = vsyncpa %s16, 0
    loop: start=0, step=1, limit=4
    $region2: #{tpu_custom_call.1} parent=1 // loop_pre_header
      _
    $region3: #{tpu_custom_call.1} parent=1 // loop_header
      %s19 = sphi 0, %s23
      %p20 = scmp.ge.s32.totalorder %s19, 4
      %s29 = sphi 0, %s31
      %s32 = sphi 0, %s29
      %s33 = sphi 0, %s32
      %s49 = sphi 0, %s33
      %s55 = sphi 0, %s57
      %s58 = sphi 0, %s55
      %s59 = sphi 0, %s58
      %s75 = sphi 0, %s59
      %s79 = sphi 0, %s79
      %s81 = sphi 0, %s79
      %s82 = sphi 0, %s81
      %s96 = sphi 0, %s82
      %s100 = sphi 0, %s100
      %s102 = sphi 0, %s100
      %s103 = sphi 0, %s102
      %s117 = sphi 0, %s103
      %s123 = sphi 0, %s125
      %s126 = sphi 0, %s123
      %s127 = sphi 0, %s126
      %s143 = sphi 0, %s127
    $region4: #{tpu_custom_call.1} parent=1 // loop_header_branch
      %22 = sbr.rel (%p20) target = $region8
    $region5: #{tpu_custom_call.1} parent=1 // loop_body
      %s24 = ssub.s32 %s19, 1
      %s25 = ssub.s32 %s19, 2
      %s26 = sadd.s32 %s19, 1
      %s27 = ssub.s32 %s19, %s26
      %p28 = scmp.eq.s32.totalorder %s27, 0
      %s30 = sadd.s32 %s29, 1
      %s31 = scalar_select %p28, %s29, %s30
      %p34 = pneg %p28
      %p35 = scmp.eq.s32.totalorder %s19, 1
      %p36 = por %p34, %p35
      %p37 = scmp.ne.s32.totalorder %s29, %s32
      %p38 = scmp.eq.s32.totalorder %s19, 0
      %p39 = por %p37, %p38
      %p40 = scmp.ne.s32.totalorder %s29, %s32
      %p41 = scmp.eq.s32.totalorder %s24, 1
      %p42 = por %p40, %p41
      %p43 = scmp.ne.s32.totalorder %s32, %s33
      %p44 = scmp.eq.s32.totalorder %s24, 0
      %p45 = por %p43, %p44
      %p46 = scmp.ne.s32.totalorder %s32, %s33
      %p47 = scmp.eq.s32.totalorder %s25, 1
      %p48 = por %p46, %p47
      %p50 = scmp.ne.s32.totalorder %s33, %s49
      %p51 = scmp.eq.s32.totalorder %s25, 0
      %p52 = por %p50, %p51
      %s53 = ssub.s32 %s19, %s26
      %p54 = scmp.eq.s32.totalorder %s53, 0
      %s56 = sadd.s32 %s55, 1
      %s57 = scalar_select %p54, %s55, %s56
      %p60 = pneg %p54
      %p61 = scmp.eq.s32.totalorder %s19, 1
      %p62 = por %p60, %p61
      %p63 = scmp.ne.s32.totalorder %s55, %s58
      %p64 = scmp.eq.s32.totalorder %s19, 0
      %p65 = por %p63, %p64
      %p66 = scmp.ne.s32.totalorder %s55, %s58
      %p67 = scmp.eq.s32.totalorder %s24, 1
      %p68 = por %p66, %p67
      %p69 = scmp.ne.s32.totalorder %s58, %s59
      %p70 = scmp.eq.s32.totalorder %s24, 0
      %p71 = por %p69, %p70
      %p72 = scmp.ne.s32.totalorder %s58, %s59
      %p73 = scmp.eq.s32.totalorder %s25, 1
      %p74 = por %p72, %p73
      %p76 = scmp.ne.s32.totalorder %s59, %s75
      %p77 = scmp.eq.s32.totalorder %s25, 0
      %p78 = por %p76, %p77
      %s80 = sadd.s32 %s79, 1
      %p83 = scmp.eq.s32.totalorder %s19, 1
      %p84 = scmp.ne.s32.totalorder %s79, %s81
      %p85 = scmp.eq.s32.totalorder %s19, 0
      %p86 = por %p84, %p85
      %p87 = scmp.ne.s32.totalorder %s79, %s81
      %p88 = scmp.eq.s32.totalorder %s24, 1
      %p89 = por %p87, %p88
      %p90 = scmp.ne.s32.totalorder %s81, %s82
      %p91 = scmp.eq.s32.totalorder %s24, 0
      %p92 = por %p90, %p91
      %p93 = scmp.ne.s32.totalorder %s81, %s82
      %p94 = scmp.eq.s32.totalorder %s25, 1
      %p95 = por %p93, %p94
      %p97 = scmp.ne.s32.totalorder %s82, %s96
      %p98 = scmp.eq.s32.totalorder %s25, 0
      %p99 = por %p97, %p98
      %s101 = sadd.s32 %s100, 1
      %p104 = scmp.eq.s32.totalorder %s19, 1
      %p105 = scmp.ne.s32.totalorder %s100, %s102
      %p106 = scmp.eq.s32.totalorder %s19, 0
      %p107 = por %p105, %p106
      %p108 = scmp.ne.s32.totalorder %s100, %s102
      %p109 = scmp.eq.s32.totalorder %s24, 1
      %p110 = por %p108, %p109
      %p111 = scmp.ne.s32.totalorder %s102, %s103
      %p112 = scmp.eq.s32.totalorder %s24, 0
      %p113 = por %p111, %p112
      %p114 = scmp.ne.s32.totalorder %s102, %s103
      %p115 = scmp.eq.s32.totalorder %s25, 1
      %p116 = por %p114, %p115
      %p118 = scmp.ne.s32.totalorder %s103, %s117
      %p119 = scmp.eq.s32.totalorder %s25, 0
      %p120 = por %p118, %p119
      %s121 = ssub.s32 %s19, %s26
      %p122 = scmp.eq.s32.totalorder %s121, 0
      %s124 = sadd.s32 %s123, 1
      %s125 = scalar_select %p122, %s123, %s124
      %p128 = pneg %p122
      %p129 = scmp.eq.s32.totalorder %s19, 1
      %p130 = por %p128, %p129
      %p131 = scmp.ne.s32.totalorder %s123, %s126
      %p132 = scmp.eq.s32.totalorder %s19, 0
      %p133 = por %p131, %p132
      %p134 = scmp.ne.s32.totalorder %s123, %s126
      %p135 = scmp.eq.s32.totalorder %s24, 1
      %p136 = por %p134, %p135
      %p137 = scmp.ne.s32.totalorder %s126, %s127
      %p138 = scmp.eq.s32.totalorder %s24, 0
      %p139 = por %p137, %p138
      %p140 = scmp.ne.s32.totalorder %s126, %s127
      %p141 = scmp.eq.s32.totalorder %s25, 1
      %p142 = por %p140, %p141
      %p144 = scmp.ne.s32.totalorder %s127, %s143
      %p145 = scmp.eq.s32.totalorder %s25, 0
      %p146 = por %p144, %p145
      %p147 = scmp.le.s32.totalorder 1, %s19
      %p148 = scmp.lt.s32.totalorder %s19, 3
      %p149 = pnand %p147, %p148
      %p150 = pneg %p149
      // Predicated region
      $region9: #{tpu_custom_call.1} parent=5 // pred_check
        _
      $region10: #{tpu_custom_call.1} parent=5 // pred_check_branch
        %152 = sbr.rel (%p149) target = $region12
      $region11: #{tpu_custom_call.1} parent=5 // pred_region
        %s153 = ssub.s32 %s19, 1
        // Predicated region
        $region13: #{tpu_custom_call.1} parent=11 // pred_check
          %p154 = pneg %p92
        $region14: #{tpu_custom_call.1} parent=11 // pred_check_branch
          %156 = sbr.rel (%p154) target = $region16
        $region15: #{tpu_custom_call.1} parent=11 // pred_region
          _
        $region16: #{tpu_custom_call.1} parent=11 // pred_fallthru
          _
        // Predicated region
        $region17: #{tpu_custom_call.1} parent=11 // pred_check
          %p157 = pneg %p113
        $region18: #{tpu_custom_call.1} parent=11 // pred_check_branch
          %159 = sbr.rel (%p157) target = $region20
        $region19: #{tpu_custom_call.1} parent=11 // pred_region
          _
        $region20: #{tpu_custom_call.1} parent=11 // pred_fallthru
          _
      $region12: #{tpu_custom_call.1} parent=5 // pred_fallthru
        _
      %p160 = scmp.lt.s32.totalorder %s19, 2
      // Predicated region
      $region21: #{tpu_custom_call.1} parent=5 // pred_check
        %p161 = pneg %p160
      $region22: #{tpu_custom_call.1} parent=5 // pred_check_branch
        %163 = sbr.rel (%p161) target = $region24
      $region23: #{tpu_custom_call.1} parent=5 // pred_region
        // Predicated region
        $region25: #{tpu_custom_call.1} parent=23 // pred_check
          %p164 = pneg %p39
        $region26: #{tpu_custom_call.1} parent=23 // pred_check_branch
          %166 = sbr.rel (%p164) target = $region28
        $region27: #{tpu_custom_call.1} parent=23 // pred_region
          %s167 = sand.u32 %s29, 1
          %s168 = scalar_lea.sflag [#allocation3], %s167
          %s169 = sand.u32 %s29, 1
          %s170 = smul.addr %s169, 8
          %s171 = scalar_lea.vmem [#allocation2], %s170
          %s173 = ssub.s32 128, 128
          %174 = vsyncadd %s168, %s173
          %s175 = smul.addr %s19, 128
          %s176 = scalar_lea.hbm %s0, %s175
          %s178 = sshll.u32 %s171, 4
          %s179 = int_to_ptr.vmem [resolvable:$true] %s178
          %181 = dma.hbm_to_vmem [thread:$0]  %s176, 128, %s179, %s168
        $region28: #{tpu_custom_call.1} parent=23 // pred_fallthru
          _
        // Predicated region
        $region29: #{tpu_custom_call.1} parent=23 // pred_check
          %p182 = pneg %p65
        $region30: #{tpu_custom_call.1} parent=23 // pred_check_branch
          %184 = sbr.rel (%p182) target = $region32
        $region31: #{tpu_custom_call.1} parent=23 // pred_region
          %s185 = sand.u32 %s55, 1
          %s186 = scalar_lea.sflag [#allocation6], %s185
          %s187 = sand.u32 %s55, 1
          %s188 = smul.addr %s187, 8
          %s189 = scalar_lea.vmem [#allocation5], %s188
          %s191 = ssub.s32 128, 128
          %192 = vsyncadd %s186, %s191
          %s193 = smul.addr %s19, 128
          %s194 = scalar_lea.hbm %s1, %s193
          %s196 = sshll.u32 %s189, 4
          %s197 = int_to_ptr.vmem [resolvable:$true] %s196
          %199 = dma.hbm_to_vmem [thread:$0]  %s194, 128, %s197, %s186
        $region32: #{tpu_custom_call.1} parent=23 // pred_fallthru
          _
      $region24: #{tpu_custom_call.1} parent=5 // pred_fallthru
        _
      %p200 = scmp.le.s32.totalorder 1, %s19
      %p201 = scmp.lt.s32.totalorder %s19, 3
      %p202 = pnand %p200, %p201
      %p203 = pneg %p202
      // Predicated region
      $region33: #{tpu_custom_call.1} parent=5 // pred_check
        _
      $region34: #{tpu_custom_call.1} parent=5 // pred_check_branch
        %205 = sbr.rel (%p202) target = $region36
      $region35: #{tpu_custom_call.1} parent=5 // pred_region
        %s206 = ssub.s32 %s19, 1
        %s207 = sand.u32 %s32, 1
        %s208 = scalar_lea.sflag [#allocation3], %s207
        %s209 = sand.u32 %s32, 1
        %s210 = smul.addr %s209, 8
        %s211 = scalar_lea.vmem [#allocation2], %s210
        // Predicated region
        $region37: #{tpu_custom_call.1} parent=35 // pred_check
          %p212 = pneg %p45
        $region38: #{tpu_custom_call.1} parent=35 // pred_check_branch
          %214 = sbr.rel (%p212) target = $region40
        $region39: #{tpu_custom_call.1} parent=35 // pred_region
          %215 = dma.done %s208, 128
        $region40: #{tpu_custom_call.1} parent=35 // pred_fallthru
          _
        %s216 = sand.u32 %s58, 1
        %s217 = scalar_lea.sflag [#allocation6], %s216
        %s218 = sand.u32 %s58, 1
        %s219 = smul.addr %s218, 8
        %s220 = scalar_lea.vmem [#allocation5], %s219
        // Predicated region
        $region41: #{tpu_custom_call.1} parent=35 // pred_check
          %p221 = pneg %p71
        $region42: #{tpu_custom_call.1} parent=35 // pred_check_branch
          %223 = sbr.rel (%p221) target = $region44
        $region43: #{tpu_custom_call.1} parent=35 // pred_region
          %224 = dma.done %s217, 128
        $region44: #{tpu_custom_call.1} parent=35 // pred_fallthru
          _
        %s225 = sand.u32 %s32, 1
        %s226 = scalar_lea.sflag [#allocation3], %s225
        %s227 = sand.u32 %s32, 1
        %s228 = smul.addr %s227, 8
        %s229 = scalar_lea.vmem [#allocation2], %s228
        %p230 = pneg %p45
        %p231 = pneg %p42
        %s232 = sand.u32 %s58, 1
        %s233 = scalar_lea.sflag [#allocation6], %s232
        %s234 = sand.u32 %s58, 1
        %s235 = smul.addr %s234, 8
        %s236 = scalar_lea.vmem [#allocation5], %s235
        %p237 = pneg %p71
        %p238 = pneg %p68
        %p239 = pneg %p92
        %p240 = pneg %p89
        %p241 = pneg %p113
        %p242 = pneg %p110
        %p243 = pneg %p139
        %p244 = pneg %p136
        %s245 = sand.u32 %s126, 1
        %s246 = scalar_lea.sflag [#allocation4], %s245
        %s247 = sand.u32 %s126, 1
        %s248 = smul.addr %s247, 8
        %s249 = scalar_lea.vmem [#allocation7], %s248
        %v250 = vld [vmem:[%s211] sm:$0xff]
        %v251 = vld [vmem:[%s220] sm:$0xff]
        %v252 = vadd.f32 %v250, %v251
        %v253 = vld [vmem:[%s2] sm:$0x1]
        %v254 = vld [vmem:[%s3] sm:$0x1]
        %255 = vadd.xlane.f32.xlu0 %v252
        %v256 = vpop.xlane.xlu0 %255
        %v257 = vmul.f32 %v256, 0.0078125
        %v258 = vsub.f32 %v252, %v257
        %v259 = vmul.f32 %v258, %v258
        %260 = vadd.xlane.f32.xlu0 %v259
        %v261 = vpop.xlane.xlu0 %260
        %v262 = vmul.f32 %v261, 0.007874016
        %v263 = vrsqrt.pop %v262
        %v264 = vmul.f32 %v262, %v263
        %vm265 = vcmp.eq.f32.partialorder %v262, inf
        %v266 = vsel %vm265, %v262, %v264
        %vm267 = vcmp.eq.f32.partialorder %v262, 0.0
        %v268 = vand.u32 %v262, 2147483648
        %v269 = vsel %vm267, %v268, %v266
        %v270 = vadd.f32 %v269, 1e-06
        %v271 = vrcp.pop %v270
        %v273 = vlaneseq
        %v274 = vshrl.u32 %v273, 7
        %v275 = vsub.s32 0, %v274
        %v276 = vrot.slane %v253, %v275
        %v278 = vmul.f32 %v271, %v276
        %v279 = vmul.f32 %v258, %v278
        %v281 = vlaneseq
        %v282 = vshrl.u32 %v281, 7
        %v283 = vsub.s32 0, %v282
        %v284 = vrot.slane %v254, %v283
        %v286 = vadd.f32 %v279, %v284
        %287 = vst [vmem:[%s249] sm:$0xff] %v286
        %s288 = sand.u32 %s126, 1
        %s289 = scalar_lea.sflag [#allocation4], %s288
        %s290 = sand.u32 %s126, 1
        %s291 = smul.addr %s290, 8
        %s292 = scalar_lea.vmem [#allocation7], %s291
        // Predicated region
        $region45: #{tpu_custom_call.1} parent=35 // pred_check
          %p293 = pneg %p136
        $region46: #{tpu_custom_call.1} parent=35 // pred_check_branch
          %295 = sbr.rel (%p293) target = $region48
        $region47: #{tpu_custom_call.1} parent=35 // pred_region
          %s297 = ssub.s32 128, 128
          %298 = vsyncadd %s289, %s297
          %s299 = smul.addr %s24, 128
          %s300 = scalar_lea.hbm %s4, %s299
          %s302 = sshll.u32 %s292, 4
          %s303 = int_to_ptr.vmem [resolvable:$true] %s302
          %305 = dma.vmem_to_hbm [thread:$0]  %s303, 128, %s300, %s289
        $region48: #{tpu_custom_call.1} parent=35 // pred_fallthru
          _
      $region36: #{tpu_custom_call.1} parent=5 // pred_fallthru
        _
      %p306 = scmp.le.s32.totalorder 2, %s19
      // Predicated region
      $region49: #{tpu_custom_call.1} parent=5 // pred_check
        %p307 = pneg %p306
      $region50: #{tpu_custom_call.1} parent=5 // pred_check_branch
        %309 = sbr.rel (%p307) target = $region52
      $region51: #{tpu_custom_call.1} parent=5 // pred_region
        %s310 = ssub.s32 %s19, 2
        // Predicated region
        $region53: #{tpu_custom_call.1} parent=51 // pred_check
          %p311 = pneg %p142
        $region54: #{tpu_custom_call.1} parent=51 // pred_check_branch
          %313 = sbr.rel (%p311) target = $region56
        $region55: #{tpu_custom_call.1} parent=51 // pred_region
          %s314 = sand.u32 %s127, 1
          %s315 = scalar_lea.sflag [#allocation4], %s314
          %s316 = sand.u32 %s127, 1
          %s317 = smul.addr %s316, 8
          %s318 = scalar_lea.vmem [#allocation7], %s317
          %319 = dma.done %s315, 128
        $region56: #{tpu_custom_call.1} parent=51 // pred_fallthru
          _
      $region52: #{tpu_custom_call.1} parent=5 // pred_fallthru
        _
    $region6: #{tpu_custom_call.1} parent=1 // loop_footer
      %s23 = sadd.s32 1, %s19
    $region7: #{tpu_custom_call.1} parent=1 // loop_footer_branch
      %18 = sbr.rel target = $region3
    $region8: #{tpu_custom_call.1} parent=1 // loop_exit
      _
    %320 = vsyncpa [#allocation3], 1
    %s321 = scalar_lea.sflag [#allocation3], 1
    %322 = vsyncpa %s321, 1
    %323 = vsyncpa [#allocation6], 1
    %s324 = scalar_lea.sflag [#allocation6], 1
    %325 = vsyncpa %s324, 1
    %326 = vsyncpa [#allocation4], 1
    %s327 = scalar_lea.sflag [#allocation4], 1
    %328 = vsyncpa %s327, 1

</llo_original>
